<compile_context>
chip_gen: v7x
topology: tpu7x:2x2x1
jax: 0.10.0
libtpu: 0.0.40
codegen_flags: <defaults>
</compile_context>

<pallas_src>
import jax
import jax.numpy as jnp
import numpy as np
from jax.experimental import pallas as pl
from jax.experimental.pallas import tpu as pltpu

LANE = 128  # every feature dim is zero-padded to the 128-lane width (lane-dense)


# ----------------------------------------------------------------------------
# Pallas kernel: one SAGE layer over one node tile.
#   h_neigh = cat([mean_j h_src_j, mean_j e_j]) @ W_msg + b_msg   (one MXU pass)
#   out     = relu(cat([h_self, h_neigh]) @ W_apply + b_apply)    (one MXU pass)
# ----------------------------------------------------------------------------
def _sage_apply_kernel(hself_ref,    # [TM, DP]      bf16  self features tile
                       msglhs_ref,   # [TM, 2*DP]    bf16  cat([h_src_mean, e_mean]) tile
                       wmsg_ref,     # [2*DP, DH]    bf16  packed W_msg (VMEM-resident)
                       bmsg_ref,     # [1, DH]       f32
                       wapp_ref,     # [DP+DH, DH]   bf16  packed W_apply (VMEM-resident)
                       bapp_ref,     # [1, DH]       f32
                       out_ref):     # [TM, DH]      bf16/f32
    # message + mailbox mean (mean already folded into the LHS by linearity)
    h_neigh = (jnp.dot(msglhs_ref[...], wmsg_ref[...],
                       preferred_element_type=jnp.float32)
               + bmsg_ref[...])                                   # [TM, DH] f32

    # apply: relu(W_apply(cat[h_self, h_neigh]))
    app_lhs = jnp.concatenate(
        [hself_ref[...], h_neigh.astype(jnp.bfloat16)], axis=-1)  # [TM, DP+DH]
    z = (jnp.dot(app_lhs, wapp_ref[...], preferred_element_type=jnp.float32)
         + bapp_ref[...])
    out_ref[...] = jnp.maximum(z, 0.0).astype(out_ref.dtype)


def sage_apply(h_self, msg_lhs, params, *, tile_m, out_dtype):
    """One SAGELayer (gather/mean already done by the caller).

    h_self  : [N, DP]    bf16   node self-features (DP = 128-padded)
    msg_lhs : [N, 2*DP]  bf16   cat([mean_j h_src_j, mean_j e_j]) per node
    returns : [N, DH]    out_dtype
    """
    n, dp = h_self.shape
    dh = params["w_app"].shape[1]
    assert n % tile_m == 0 and tile_m % 8 == 0

    def const(shape):
        return pl.BlockSpec(shape, lambda i, _s=shape: tuple(0 for _ in _s))

    grid_spec = pltpu.PrefetchScalarGridSpec(
        num_scalar_prefetch=0,
        grid=(n // tile_m,),
        in_specs=[
            pl.BlockSpec((tile_m, dp), lambda i: (i, 0)),        # h_self tile
            pl.BlockSpec((tile_m, 2 * dp), lambda i: (i, 0)),    # message LHS tile
            const(params["w_msg"].shape),                        # VMEM-resident weights
            const(params["b_msg"].shape),
            const(params["w_app"].shape),
            const(params["b_app"].shape),
        ],
        out_specs=pl.BlockSpec((tile_m, dh), lambda i: (i, 0)),
    )

    return pl.pallas_call(
        _sage_apply_kernel,
        out_shape=jax.ShapeDtypeStruct((n, dh), out_dtype),
        grid_spec=grid_spec,
        compiler_params=pltpu.CompilerParams(
            dimension_semantics=("parallel",),       # node tiles split across TCs
            # actual footprint is <1 MiB/tile; 32 MiB fits v5e/v6e/v7x comfortably
            vmem_limit_bytes=32 * 1024 * 1024),
    )(h_self, msg_lhs,
      params["w_msg"], params["b_msg"], params["w_app"], params["b_app"])


# ----------------------------------------------------------------------------
# Two-layer GraphSAGE forward (ndim_in -> hidden -> ndim_out), dropout identity.
# Gather + mailbox mean done in XLA; kernels only do matmuls + finalize.
# ----------------------------------------------------------------------------
def sage_forward(nfeats, efeats, src_slot2d, params_l1, params_l2,
                 *, ndim_out, tile_m):
    n = nfeats.shape[0]
    k = src_slot2d.shape[0]

    # squeeze the singleton middle dim ([N,1,D]/[E,1,D]) and pad to 128 lanes
    h0 = jnp.pad(nfeats[:, 0, :], ((0, 0), (0, LANE - nfeats.shape[-1])))
    e = jnp.pad(efeats[:, 0, :], ((0, 0), (0, LANE - efeats.shape[-1])))

    # mailbox mean of edge features per destination node — computed ONCE,
    # reused by both layers (edge ids are dst-major contiguous, fixed fan-in K).
    e_mean = e.reshape(n, k, LANE).mean(axis=1)                       # [N, DP] f32

    def msg_lhs(h):
        # gather + mailbox mean of source-node features in XLA, concatenated
        # with e_mean into one lane-dense [N, 2*DP] bf16 MXU LHS.
        h_src_mean = jnp.mean(h[src_slot2d].astype(jnp.float32), axis=0)
        return jnp.concatenate([h_src_mean, e_mean], axis=-1).astype(jnp.bfloat16)

    h1 = sage_apply(h0.astype(jnp.bfloat16), msg_lhs(h0), params_l1,
                    tile_m=tile_m, out_dtype=jnp.bfloat16)           # [N, 128] bf16
    # nn.Dropout between layers -> identity in eval mode.
    h2 = sage_apply(h1, msg_lhs(h1), params_l2,
                    tile_m=tile_m, out_dtype=jnp.float32)            # [N, 128] f32
    return h2[:, :ndim_out]   # strip lane padding of the last layer


# ----------------------------------------------------------------------------
# Parameters: nn.Linear-style init, packed into 256-deep-contraction blocks,
# zero-padded to lane-dense shapes; weights bf16 (MXU inputs), biases f32.
# ----------------------------------------------------------------------------
def init_layer_params(key, ndim_in, edim, ndim_out, *, dp=LANE, dh=LANE):
    keys = jax.random.split(key, 4)
    fan_msg = ndim_in + edim
    fan_app = ndim_in + ndim_out
    lm = 1.0 / np.sqrt(fan_msg)
    la = 1.0 / np.sqrt(fan_app)
    w_msg = jax.random.uniform(keys[0], (fan_msg, ndim_out), jnp.float32, -lm, lm)
    b_msg = jax.random.uniform(keys[1], (1, ndim_out), jnp.float32, -lm, lm)
    w_app = jax.random.uniform(keys[2], (fan_app, ndim_out), jnp.float32, -la, la)
    b_app = jax.random.uniform(keys[3], (1, ndim_out), jnp.float32, -la, la)

    # packed W_msg: rows [0:dp) take the node part, rows [dp:2dp) the edge part
    w_msg_p = jnp.zeros((2 * dp, dh), jnp.float32)
    w_msg_p = w_msg_p.at[:ndim_in, :ndim_out].set(w_msg[:ndim_in])
    w_msg_p = w_msg_p.at[dp:dp + edim, :ndim_out].set(w_msg[ndim_in:])
    # packed W_apply: rows [0:dp) self part, rows [dp:dp+dh) neighbour part
    w_app_p = jnp.zeros((dp + dh, dh), jnp.float32)
    w_app_p = w_app_p.at[:ndim_in, :ndim_out].set(w_app[:ndim_in])
    w_app_p = w_app_p.at[dp:dp + ndim_out, :ndim_out].set(w_app[ndim_in:])

    return {
        "w_msg": w_msg_p.astype(jnp.bfloat16),
        "b_msg": jnp.pad(b_msg, ((0, 0), (0, dh - ndim_out))),
        "w_app": w_app_p.astype(jnp.bfloat16),
        "b_app": jnp.pad(b_app, ((0, 0), (0, dh - ndim_out))),
    }


# ----------------------------------------------------------------------------
# Pure-JAX reference mirroring the same padded / packed / bf16 math.
# (Mean-before-matmul is mathematically identical to the module's
#  per-edge-message + mailbox-mean order because W_msg is linear.)
# ----------------------------------------------------------------------------
def ref_apply(h_self_bf16, msg_lhs_bf16, p):
    h_neigh = (jnp.dot(msg_lhs_bf16, p["w_msg"],
                       preferred_element_type=jnp.float32) + p["b_msg"])
    lhs = jnp.concatenate([h_self_bf16, h_neigh.astype(jnp.bfloat16)], axis=-1)
    z = jnp.dot(lhs, p["w_app"], preferred_element_type=jnp.float32) + p["b_app"]
    return jnp.maximum(z, 0.0)


if __name__ == "__main__":
    # Small synthetic graph with fixed fan-in K:
    # node v receives edges from (v+1 .. v+K) mod N; edge id = v*K + j.
    N, K = 256, 4
    E = N * K
    ndim_in, edim, hidden, ndim_out = 32, 16, 128, 32
    TILE_M = 128                      # grid = (2,) -> both TCs get a node tile

    dst = np.repeat(np.arange(N), K)
    src = (dst + np.tile(np.arange(1, K + 1), N)) % N
    # src_slot2d[j, v] = source node of node v's j-th in-edge
    src_slot2d = jnp.asarray(src.reshape(N, K).T.astype(np.int32))   # [K, N]

    key = jax.random.PRNGKey(0)
    k_n, k_e, k_p1, k_p2 = jax.random.split(key, 4)
    nfeats = jax.random.normal(k_n, (N, 1, ndim_in), jnp.float32)
    efeats = jax.random.normal(k_e, (E, 1, edim), jnp.float32)

    params_l1 = init_layer_params(k_p1, ndim_in, edim, hidden)
    params_l2 = init_layer_params(k_p2, hidden, edim, ndim_out)

    out = sage_forward(nfeats, efeats, src_slot2d, params_l1, params_l2,
                       ndim_out=ndim_out, tile_m=TILE_M)
    out = jax.block_until_ready(out)

    # reference (same packed / padded / bf16 math, plain JAX)
    h0 = jnp.pad(nfeats[:, 0, :], ((0, 0), (0, LANE - ndim_in)))
    e_pad = jnp.pad(efeats[:, 0, :], ((0, 0), (0, LANE - edim)))
    e_mean = e_pad.reshape(N, K, LANE).mean(axis=1)

    def mk_lhs(h):
        h_src_mean = jnp.mean(h[src_slot2d].astype(jnp.float32), axis=0)
        return jnp.concatenate([h_src_mean, e_mean], axis=-1).astype(jnp.bfloat16)

    r1 = ref_apply(h0.astype(jnp.bfloat16), mk_lhs(h0), params_l1).astype(jnp.bfloat16)
    r2 = ref_apply(r1, mk_lhs(r1), params_l2)
    ref = r2[:, :ndim_out]

    np.testing.assert_allclose(np.asarray(out), np.asarray(ref),
                               rtol=2e-2, atol=2e-2)
    assert out.shape == (N, ndim_out)
    print("KERNEL_OK")
</pallas_src>

<mosaic_0001>
module attributes {stable_mosaic.version = 11 : i64} {
  func.func @_sage_apply_kernel(%arg0: i32, %arg1: memref<128x128xbf16, #tpu.memory_space<vmem>>, %arg2: memref<128x256xbf16, #tpu.memory_space<vmem>>, %arg3: memref<256x128xbf16, #tpu.memory_space<vmem>>, %arg4: memref<1x128xf32, #tpu.memory_space<vmem>>, %arg5: memref<256x128xbf16, #tpu.memory_space<vmem>>, %arg6: memref<1x128xf32, #tpu.memory_space<vmem>>, %arg7: memref<128x128xbf16, #tpu.memory_space<vmem>>) attributes {dimension_semantics = [#tpu.dimension_semantics<parallel>], iteration_bounds = array<i64: 2>, scalar_prefetch = 0 : i64, scratch_operands = 0 : i64, tpu.core_type = #tpu.core_type<tc>, window_params = [{transform_indices = @transform_0, window_bounds = array<i64: 128, 128>}, {transform_indices = @transform_1, window_bounds = array<i64: 128, 256>}, {pipeline_mode = #tpu.pipeline_mode<synchronous>, transform_indices = @transform_2, window_bounds = array<i64: 256, 128>}, {pipeline_mode = #tpu.pipeline_mode<synchronous>, transform_indices = @transform_3, window_bounds = array<i64: 1, 128>}, {pipeline_mode = #tpu.pipeline_mode<synchronous>, transform_indices = @transform_4, window_bounds = array<i64: 256, 128>}, {pipeline_mode = #tpu.pipeline_mode<synchronous>, transform_indices = @transform_5, window_bounds = array<i64: 1, 128>}, {transform_indices = @transform_6, window_bounds = array<i64: 128, 128>}]} {
    %c0 = arith.constant 0 : index
    %c0_0 = arith.constant 0 : index
    %0 = vector.load %arg2[%c0, %c0_0] : memref<128x256xbf16, #tpu.memory_space<vmem>>, vector<128x256xbf16>
    %c0_1 = arith.constant 0 : index
    %c0_2 = arith.constant 0 : index
    %1 = vector.load %arg3[%c0_1, %c0_2] : memref<256x128xbf16, #tpu.memory_space<vmem>>, vector<256x128xbf16>
    %cst = arith.constant dense<0.000000e+00> : vector<128x128xf32>
    %2 = tpu.matmul %0, %1, %cst {dimension_numbers = #tpu.dot_dimension_numbers<[1], [0], [0], [1], [0, 0, 1, 1], [], []>} : vector<128x256xbf16>, vector<256x128xbf16>, vector<128x128xf32> -> vector<128x128xf32>
    %c0_3 = arith.constant 0 : index
    %c0_4 = arith.constant 0 : index
    %3 = vector.load %arg4[%c0_3, %c0_4] : memref<1x128xf32, #tpu.memory_space<vmem>>, vector<1x128xf32>
    %4 = vector.broadcast %3 : vector<1x128xf32> to vector<128x128xf32>
    %5 = arith.addf %2, %4 : vector<128x128xf32>
    %c0_5 = arith.constant 0 : index
    %c0_6 = arith.constant 0 : index
    %6 = vector.load %arg1[%c0_5, %c0_6] : memref<128x128xbf16, #tpu.memory_space<vmem>>, vector<128x128xbf16>
    %7 = arith.truncf %5 : vector<128x128xf32> to vector<128x128xbf16>
    %8 = tpu.concatenate %6, %7 in 1 : vector<128x128xbf16>, vector<128x128xbf16> -> vector<128x256xbf16>
    %c0_7 = arith.constant 0 : index
    %c0_8 = arith.constant 0 : index
    %9 = vector.load %arg5[%c0_7, %c0_8] : memref<256x128xbf16, #tpu.memory_space<vmem>>, vector<256x128xbf16>
    %cst_9 = arith.constant dense<0.000000e+00> : vector<128x128xf32>
    %10 = tpu.matmul %8, %9, %cst_9 {dimension_numbers = #tpu.dot_dimension_numbers<[1], [0], [0], [1], [0, 0, 1, 1], [], []>} : vector<128x256xbf16>, vector<256x128xbf16>, vector<128x128xf32> -> vector<128x128xf32>
    %c0_10 = arith.constant 0 : index
    %c0_11 = arith.constant 0 : index
    %11 = vector.load %arg6[%c0_10, %c0_11] : memref<1x128xf32, #tpu.memory_space<vmem>>, vector<1x128xf32>
    %12 = vector.broadcast %11 : vector<1x128xf32> to vector<128x128xf32>
    %13 = arith.addf %10, %12 : vector<128x128xf32>
    %cst_12 = arith.constant 0.000000e+00 : f32
    %14 = vector.broadcast %cst_12 : f32 to vector<128x128xf32>
    %15 = arith.maximumf %13, %14 : vector<128x128xf32>
    %16 = arith.truncf %15 : vector<128x128xf32> to vector<128x128xbf16>
    %c0_13 = arith.constant 0 : index
    %c0_14 = arith.constant 0 : index
    %17 = vector.load %arg7[%c0_13, %c0_14] : memref<128x128xbf16, #tpu.memory_space<vmem>>, vector<128x128xbf16>
    tpu.vector_store %arg7[%c0_13, %c0_14], %16 {strides = array<i32>} : memref<128x128xbf16, #tpu.memory_space<vmem>>, vector<128x128xbf16>,
    return
  }
  func.func @transform_0(%arg0: i32) -> (i32, i32) {
    %c0_i32 = arith.constant 0 : i32
    %c0_i32_0 = arith.constant 0 : i32
    return %arg0, %c0_i32 : i32, i32
  }
  func.func @transform_1(%arg0: i32) -> (i32, i32) {
    %c0_i32 = arith.constant 0 : i32
    %c0_i32_0 = arith.constant 0 : i32
    return %arg0, %c0_i32 : i32, i32
  }
  func.func @transform_2(%arg0: i32) -> (i32, i32) {
    %c0_i32 = arith.constant 0 : i32
    %c0_i32_0 = arith.constant 0 : i32
    %c0_i32_1 = arith.constant 0 : i32
    return %c0_i32, %c0_i32_0 : i32, i32
  }
  func.func @transform_3(%arg0: i32) -> (i32, i32) {
    %c0_i32 = arith.constant 0 : i32
    %c0_i32_0 = arith.constant 0 : i32
    %c0_i32_1 = arith.constant 0 : i32
    return %c0_i32, %c0_i32_0 : i32, i32
  }
  func.func @transform_4(%arg0: i32) -> (i32, i32) {
    %c0_i32 = arith.constant 0 : i32
    %c0_i32_0 = arith.constant 0 : i32
    %c0_i32_1 = arith.constant 0 : i32
    return %c0_i32, %c0_i32_0 : i32, i32
  }
  func.func @transform_5(%arg0: i32) -> (i32, i32) {
    %c0_i32 = arith.constant 0 : i32
    %c0_i32_0 = arith.constant 0 : i32
    %c0_i32_1 = arith.constant 0 : i32
    return %c0_i32, %c0_i32_0 : i32, i32
  }
  func.func @transform_6(%arg0: i32) -> (i32, i32) {
    %c0_i32 = arith.constant 0 : i32
    %c0_i32_0 = arith.constant 0 : i32
    return %arg0, %c0_i32 : i32, i32
  }
}

</mosaic_0001>

<llo_original>
// kernel: tpu_custom_call.1
$region0: #{tpu_custom_call.1}
  #allocation0 [shape = 'u32[]', space=smem, size = 0x4, offset = 0x4, fixed_abs, tag = 'smem constant byte address 0x4 - core index']
  #allocation1 [shape = 'u32[144,128]{1,0:T(1,128)}', space=vmem, size = 0x12000, scoped, tag = 'internal scratch']
  %s0 = inlined_call_operand.hbm [shape: bf16[256,128], index: 0, kind: input, shape index: {}]
  %s1 = inlined_call_operand.hbm [shape: bf16[256,256], index: 1, kind: input, shape index: {}]
  %s2 = inlined_call_operand.hbm [shape: bf16[256,128], index: 2, kind: input, shape index: {}]
  %s3 = inlined_call_operand.vmem [shape: f32[1,128], index: 3, kind: input, shape index: {}]
  %s4 = inlined_call_operand.hbm [shape: bf16[256,128], index: 4, kind: input, shape index: {}]
  %s5 = inlined_call_operand.vmem [shape: f32[1,128], index: 5, kind: input, shape index: {}]
  %s6 = inlined_call_operand.hbm [shape: bf16[256,128], index: 6, kind: output, shape index: {}]
  %s7 = sld [smem:[#allocation0]]
  $region73: #{tpu_custom_call.1} parent=0
    _
  %s9 = ssub.s32 1, %s7
  %s10 = scalar_select 0, %s9, %s7
  $region1: #{tpu_custom_call.1} parent=0
    #allocation2 [shape = 'u8[65536]{0}', space=vmem, size = 0x10000, scoped, tag = 'input window, operand 0']
    #allocation3 [shape = 's32[2]{0}', space=sflag, size = 0x8, scoped, tag = 'scoped memory for tpu_custom_call.1']
    #allocation4 [shape = 's32[2]{0}', space=sflag, size = 0x8, scoped, tag = 'scoped memory for tpu_custom_call.1']
    #allocation5 [shape = 'u8[131072]{0}', space=vmem, size = 0x20000, scoped, tag = 'input window, operand 1']
    #allocation6 [shape = 's32[2]{0}', space=sflag, size = 0x8, scoped, tag = 'scoped memory for tpu_custom_call.1']
    #allocation7 [shape = 'u8[65536]{0}', space=vmem, size = 0x10000, scoped, tag = 'input window, operand 2, single buffered']
    #allocation8 [shape = 'u8[65536]{0}', space=vmem, size = 0x10000, scoped, tag = 'input window, operand 4, single buffered']
    #allocation9 [shape = 's32[1]{0}', space=sflag, size = 0x4, scoped, tag = 'scoped memory for tpu_custom_call.1']
    #allocation10 [shape = 'u8[65536]{0}', space=vmem, size = 0x10000, scoped, tag = 'output window, operand 0']
    %11 = vsyncpa [#allocation3], 0
    %s12 = scalar_lea.sflag [#allocation3], 1
    %13 = vsyncpa %s12, 0
    %14 = vsyncpa [#allocation6], 0
    %s15 = scalar_lea.sflag [#allocation6], 1
    %16 = vsyncpa %s15, 0
    %17 = vsyncpa [#allocation9], 0
    %18 = vsyncpa [#allocation4], 0
    %s19 = scalar_lea.sflag [#allocation4], 1
    %20 = vsyncpa %s19, 0
    loop: start=0, step=1, limit=4
    $region2: #{tpu_custom_call.1} parent=1 // loop_pre_header
      _
    $region3: #{tpu_custom_call.1} parent=1 // loop_header
      %s22 = sphi 0, %s26
      %p23 = scmp.ge.s32.totalorder %s22, 4
      %s32 = sphi 0, %s34
      %s35 = sphi 0, %s32
      %s36 = sphi 0, %s35
      %s52 = sphi 0, %s36
      %s58 = sphi 0, %s60
      %s61 = sphi 0, %s58
      %s62 = sphi 0, %s61
      %s78 = sphi 0, %s62
      %s82 = sphi 0, %s82
      %s84 = sphi 0, %s82
      %s85 = sphi 0, %s84
      %s99 = sphi 0, %s85
      %s103 = sphi 0, %s103
      %s105 = sphi 0, %s103
      %s106 = sphi 0, %s105
      %s120 = sphi 0, %s106
      %s124 = sphi 0, %s124
      %s126 = sphi 0, %s124
      %s127 = sphi 0, %s126
      %s141 = sphi 0, %s127
      %s145 = sphi 0, %s145
      %s147 = sphi 0, %s145
      %s148 = sphi 0, %s147
      %s162 = sphi 0, %s148
      %s168 = sphi 0, %s170
      %s171 = sphi 0, %s168
      %s172 = sphi 0, %s171
      %s188 = sphi 0, %s172
    $region4: #{tpu_custom_call.1} parent=1 // loop_header_branch
      %25 = sbr.rel (%p23) target = $region8
    $region5: #{tpu_custom_call.1} parent=1 // loop_body
      %s27 = ssub.s32 %s22, 1
      %s28 = ssub.s32 %s22, 2
      %s29 = sadd.s32 %s22, 1
      %s30 = ssub.s32 %s22, %s29
      %p31 = scmp.eq.s32.totalorder %s30, 0
      %s33 = sadd.s32 %s32, 1
      %s34 = scalar_select %p31, %s32, %s33
      %p37 = pneg %p31
      %p38 = scmp.eq.s32.totalorder %s22, 1
      %p39 = por %p37, %p38
      %p40 = scmp.ne.s32.totalorder %s32, %s35
      %p41 = scmp.eq.s32.totalorder %s22, 0
      %p42 = por %p40, %p41
      %p43 = scmp.ne.s32.totalorder %s32, %s35
      %p44 = scmp.eq.s32.totalorder %s27, 1
      %p45 = por %p43, %p44
      %p46 = scmp.ne.s32.totalorder %s35, %s36
      %p47 = scmp.eq.s32.totalorder %s27, 0
      %p48 = por %p46, %p47
      %p49 = scmp.ne.s32.totalorder %s35, %s36
      %p50 = scmp.eq.s32.totalorder %s28, 1
      %p51 = por %p49, %p50
      %p53 = scmp.ne.s32.totalorder %s36, %s52
      %p54 = scmp.eq.s32.totalorder %s28, 0
      %p55 = por %p53, %p54
      %s56 = ssub.s32 %s22, %s29
      %p57 = scmp.eq.s32.totalorder %s56, 0
      %s59 = sadd.s32 %s58, 1
      %s60 = scalar_select %p57, %s58, %s59
      %p63 = pneg %p57
      %p64 = scmp.eq.s32.totalorder %s22, 1
      %p65 = por %p63, %p64
      %p66 = scmp.ne.s32.totalorder %s58, %s61
      %p67 = scmp.eq.s32.totalorder %s22, 0
      %p68 = por %p66, %p67
      %p69 = scmp.ne.s32.totalorder %s58, %s61
      %p70 = scmp.eq.s32.totalorder %s27, 1
      %p71 = por %p69, %p70
      %p72 = scmp.ne.s32.totalorder %s61, %s62
      %p73 = scmp.eq.s32.totalorder %s27, 0
      %p74 = por %p72, %p73
      %p75 = scmp.ne.s32.totalorder %s61, %s62
      %p76 = scmp.eq.s32.totalorder %s28, 1
      %p77 = por %p75, %p76
      %p79 = scmp.ne.s32.totalorder %s62, %s78
      %p80 = scmp.eq.s32.totalorder %s28, 0
      %p81 = por %p79, %p80
      %s83 = sadd.s32 %s82, 1
      %p86 = scmp.eq.s32.totalorder %s22, 1
      %p87 = scmp.ne.s32.totalorder %s82, %s84
      %p88 = scmp.eq.s32.totalorder %s22, 0
      %p89 = por %p87, %p88
      %p90 = scmp.ne.s32.totalorder %s82, %s84
      %p91 = scmp.eq.s32.totalorder %s27, 1
      %p92 = por %p90, %p91
      %p93 = scmp.ne.s32.totalorder %s84, %s85
      %p94 = scmp.eq.s32.totalorder %s27, 0
      %p95 = por %p93, %p94
      %p96 = scmp.ne.s32.totalorder %s84, %s85
      %p97 = scmp.eq.s32.totalorder %s28, 1
      %p98 = por %p96, %p97
      %p100 = scmp.ne.s32.totalorder %s85, %s99
      %p101 = scmp.eq.s32.totalorder %s28, 0
      %p102 = por %p100, %p101
      %s104 = sadd.s32 %s103, 1
      %p107 = scmp.eq.s32.totalorder %s22, 1
      %p108 = scmp.ne.s32.totalorder %s103, %s105
      %p109 = scmp.eq.s32.totalorder %s22, 0
      %p110 = por %p108, %p109
      %p111 = scmp.ne.s32.totalorder %s103, %s105
      %p112 = scmp.eq.s32.totalorder %s27, 1
      %p113 = por %p111, %p112
      %p114 = scmp.ne.s32.totalorder %s105, %s106
      %p115 = scmp.eq.s32.totalorder %s27, 0
      %p116 = por %p114, %p115
      %p117 = scmp.ne.s32.totalorder %s105, %s106
      %p118 = scmp.eq.s32.totalorder %s28, 1
      %p119 = por %p117, %p118
      %p121 = scmp.ne.s32.totalorder %s106, %s120
      %p122 = scmp.eq.s32.totalorder %s28, 0
      %p123 = por %p121, %p122
      %s125 = sadd.s32 %s124, 1
      %p128 = scmp.eq.s32.totalorder %s22, 1
      %p129 = scmp.ne.s32.totalorder %s124, %s126
      %p130 = scmp.eq.s32.totalorder %s22, 0
      %p131 = por %p129, %p130
      %p132 = scmp.ne.s32.totalorder %s124, %s126
      %p133 = scmp.eq.s32.totalorder %s27, 1
      %p134 = por %p132, %p133
      %p135 = scmp.ne.s32.totalorder %s126, %s127
      %p136 = scmp.eq.s32.totalorder %s27, 0
      %p137 = por %p135, %p136
      %p138 = scmp.ne.s32.totalorder %s126, %s127
      %p139 = scmp.eq.s32.totalorder %s28, 1
      %p140 = por %p138, %p139
      %p142 = scmp.ne.s32.totalorder %s127, %s141
      %p143 = scmp.eq.s32.totalorder %s28, 0
      %p144 = por %p142, %p143
      %s146 = sadd.s32 %s145, 1
      %p149 = scmp.eq.s32.totalorder %s22, 1
      %p150 = scmp.ne.s32.totalorder %s145, %s147
      %p151 = scmp.eq.s32.totalorder %s22, 0
      %p152 = por %p150, %p151
      %p153 = scmp.ne.s32.totalorder %s145, %s147
      %p154 = scmp.eq.s32.totalorder %s27, 1
      %p155 = por %p153, %p154
      %p156 = scmp.ne.s32.totalorder %s147, %s148
      %p157 = scmp.eq.s32.totalorder %s27, 0
      %p158 = por %p156, %p157
      %p159 = scmp.ne.s32.totalorder %s147, %s148
      %p160 = scmp.eq.s32.totalorder %s28, 1
      %p161 = por %p159, %p160
      %p163 = scmp.ne.s32.totalorder %s148, %s162
      %p164 = scmp.eq.s32.totalorder %s28, 0
      %p165 = por %p163, %p164
      %s166 = ssub.s32 %s22, %s29
      %p167 = scmp.eq.s32.totalorder %s166, 0
      %s169 = sadd.s32 %s168, 1
      %s170 = scalar_select %p167, %s168, %s169
      %p173 = pneg %p167
      %p174 = scmp.eq.s32.totalorder %s22, 1
      %p175 = por %p173, %p174
      %p176 = scmp.ne.s32.totalorder %s168, %s171
      %p177 = scmp.eq.s32.totalorder %s22, 0
      %p178 = por %p176, %p177
      %p179 = scmp.ne.s32.totalorder %s168, %s171
      %p180 = scmp.eq.s32.totalorder %s27, 1
      %p181 = por %p179, %p180
      %p182 = scmp.ne.s32.totalorder %s171, %s172
      %p183 = scmp.eq.s32.totalorder %s27, 0
      %p184 = por %p182, %p183
      %p185 = scmp.ne.s32.totalorder %s171, %s172
      %p186 = scmp.eq.s32.totalorder %s28, 1
      %p187 = por %p185, %p186
      %p189 = scmp.ne.s32.totalorder %s172, %s188
      %p190 = scmp.eq.s32.totalorder %s28, 0
      %p191 = por %p189, %p190
      %p192 = scmp.le.s32.totalorder 1, %s22
      %p193 = scmp.lt.s32.totalorder %s22, 3
      %p194 = pnand %p192, %p193
      %p195 = pneg %p194
      // Predicated region
      $region9: #{tpu_custom_call.1} parent=5 // pred_check
        _
      $region10: #{tpu_custom_call.1} parent=5 // pred_check_branch
        %197 = sbr.rel (%p194) target = $region12
      $region11: #{tpu_custom_call.1} parent=5 // pred_region
        %s198 = ssub.s32 %s22, 1
        // Predicated region
        $region13: #{tpu_custom_call.1} parent=11 // pred_check
          %p199 = pneg %p95
        $region14: #{tpu_custom_call.1} parent=11 // pred_check_branch
          %201 = sbr.rel (%p199) target = $region16
        $region15: #{tpu_custom_call.1} parent=11 // pred_region
          %s203 = ssub.s32 2048, 2048
          %204 = vsyncadd [#allocation6], %s203
          %s205 = sshll.u32 [#allocation7], 4
          %s206 = int_to_ptr.vmem [resolvable:$true] %s205
          %211 = dma.hbm_to_vmem [thread:$0]  %s2, 2048, %s206, [#allocation6], 64, 64, 4
        $region16: #{tpu_custom_call.1} parent=11 // pred_fallthru
          _
        // Predicated region
        $region17: #{tpu_custom_call.1} parent=11 // pred_check
          %p212 = pneg %p116
        $region18: #{tpu_custom_call.1} parent=11 // pred_check_branch
          %214 = sbr.rel (%p212) target = $region20
        $region19: #{tpu_custom_call.1} parent=11 // pred_region
          _
        $region20: #{tpu_custom_call.1} parent=11 // pred_fallthru
          _
        // Predicated region
        $region21: #{tpu_custom_call.1} parent=11 // pred_check
          %p215 = pneg %p137
        $region22: #{tpu_custom_call.1} parent=11 // pred_check_branch
          %217 = sbr.rel (%p215) target = $region24
        $region23: #{tpu_custom_call.1} parent=11 // pred_region
          %s219 = ssub.s32 2048, 2048
          %220 = vsyncadd [#allocation9], %s219
          %s221 = sshll.u32 [#allocation8], 4
          %s222 = int_to_ptr.vmem [resolvable:$true] %s221
          %227 = dma.hbm_to_vmem [thread:$0]  %s4, 2048, %s222, [#allocation9], 64, 64, 4
        $region24: #{tpu_custom_call.1} parent=11 // pred_fallthru
          _
        // Predicated region
        $region25: #{tpu_custom_call.1} parent=11 // pred_check
          %p228 = pneg %p158
        $region26: #{tpu_custom_call.1} parent=11 // pred_check_branch
          %230 = sbr.rel (%p228) target = $region28
        $region27: #{tpu_custom_call.1} parent=11 // pred_region
          _
        $region28: #{tpu_custom_call.1} parent=11 // pred_fallthru
          _
      $region12: #{tpu_custom_call.1} parent=5 // pred_fallthru
        _
      %p231 = scmp.lt.s32.totalorder %s22, 2
      // Predicated region
      $region29: #{tpu_custom_call.1} parent=5 // pred_check
        %p232 = pneg %p231
      $region30: #{tpu_custom_call.1} parent=5 // pred_check_branch
        %234 = sbr.rel (%p232) target = $region32
      $region31: #{tpu_custom_call.1} parent=5 // pred_region
        // Predicated region
        $region33: #{tpu_custom_call.1} parent=31 // pred_check
          %p235 = pneg %p42
        $region34: #{tpu_custom_call.1} parent=31 // pred_check_branch
          %237 = sbr.rel (%p235) target = $region36
        $region35: #{tpu_custom_call.1} parent=31 // pred_region
          %s238 = sand.u32 %s32, 1
          %s239 = scalar_lea.sflag [#allocation3], %s238
          %s240 = sand.u32 %s32, 1
          %s241 = smul.addr %s240, 64
          %s242 = scalar_lea.vmem [#allocation2], %s241
          %s243 = smul.u32 16, %s22
          %s245 = ssub.s32 1024, 1024
          %246 = vsyncadd %s239, %s245
          %s247 = smul.addr %s243, 64
          %s248 = scalar_lea.hbm %s0, %s247
          %s249 = sshll.u32 %s242, 4
          %s250 = int_to_ptr.vmem [resolvable:$true] %s249
          %255 = dma.hbm_to_vmem [thread:$0]  %s248, 1024, %s250, %s239, 64, 64, 4
        $region36: #{tpu_custom_call.1} parent=31 // pred_fallthru
          _
        // Predicated region
        $region37: #{tpu_custom_call.1} parent=31 // pred_check
          %p256 = pneg %p68
        $region38: #{tpu_custom_call.1} parent=31 // pred_check_branch
          %258 = sbr.rel (%p256) target = $region40
        $region39: #{tpu_custom_call.1} parent=31 // pred_region
          %s259 = sand.u32 %s22, 1
          %s260 = scalar_lea.sflag [#allocation6], %s259
          %s261 = sand.u32 %s58, 1
          %s262 = smul.addr %s261, 128
          %s263 = scalar_lea.vmem [#allocation5], %s262
          %s264 = smul.u32 16, %s22
          %s266 = ssub.s32 2048, 2048
          %267 = vsyncadd %s260, %s266
          %s268 = smul.addr %s264, 2
          %s269 = smul.addr %s268, 64
          %s270 = scalar_lea.hbm %s1, %s269
          %s271 = sshll.u32 %s263, 4
          %s272 = int_to_ptr.vmem [resolvable:$true] %s271
          %277 = dma.hbm_to_vmem [thread:$0]  %s270, 2048, %s272, %s260, 128, 128, 8
        $region40: #{tpu_custom_call.1} parent=31 // pred_fallthru
          _
      $region32: #{tpu_custom_call.1} parent=5 // pred_fallthru
        _
      %p278 = scmp.le.s32.totalorder 1, %s22
      %p279 = scmp.lt.s32.totalorder %s22, 3
      %p280 = pnand %p278, %p279
      %p281 = pneg %p280
      // Predicated region
      $region41: #{tpu_custom_call.1} parent=5 // pred_check
        _
      $region42: #{tpu_custom_call.1} parent=5 // pred_check_branch
        %283 = sbr.rel (%p280) target = $region44
      $region43: #{tpu_custom_call.1} parent=5 // pred_region
        %s284 = ssub.s32 %s22, 1
        %s285 = sand.u32 %s35, 1
        %s286 = scalar_lea.sflag [#allocation3], %s285
        %s287 = sand.u32 %s35, 1
        %s288 = smul.addr %s287, 64
        %s289 = scalar_lea.vmem [#allocation2], %s288
        // Predicated region
        $region45: #{tpu_custom_call.1} parent=43 // pred_check
          %p290 = pneg %p48
        $region46: #{tpu_custom_call.1} parent=43 // pred_check_branch
          %292 = sbr.rel (%p290) target = $region48
        $region47: #{tpu_custom_call.1} parent=43 // pred_region
          %293 = dma.done %s286, 1024
        $region48: #{tpu_custom_call.1} parent=43 // pred_fallthru
          _
        %s294 = sand.u32 %s27, 1
        %s295 = scalar_lea.sflag [#allocation6], %s294
        %s296 = sand.u32 %s61, 1
        %s297 = smul.addr %s296, 128
        %s298 = scalar_lea.vmem [#allocation5], %s297
        // Predicated region
        $region49: #{tpu_custom_call.1} parent=43 // pred_check
          %p299 = pneg %p74
        $region50: #{tpu_custom_call.1} parent=43 // pred_check_branch
          %301 = sbr.rel (%p299) target = $region52
        $region51: #{tpu_custom_call.1} parent=43 // pred_region
          %302 = dma.done %s295, 2048
        $region52: #{tpu_custom_call.1} parent=43 // pred_fallthru
          _
        // Predicated region
        $region53: #{tpu_custom_call.1} parent=43 // pred_check
          %p303 = pneg %p95
        $region54: #{tpu_custom_call.1} parent=43 // pred_check_branch
          %305 = sbr.rel (%p303) target = $region56
        $region55: #{tpu_custom_call.1} parent=43 // pred_region
          %306 = dma.done [#allocation6], 2048
        $region56: #{tpu_custom_call.1} parent=43 // pred_fallthru
          _
        // Predicated region
        $region57: #{tpu_custom_call.1} parent=43 // pred_check
          %p307 = pneg %p137
        $region58: #{tpu_custom_call.1} parent=43 // pred_check_branch
          %309 = sbr.rel (%p307) target = $region60
        $region59: #{tpu_custom_call.1} parent=43 // pred_region
          %310 = dma.done [#allocation9], 2048
        $region60: #{tpu_custom_call.1} parent=43 // pred_fallthru
          _
        %s311 = sand.u32 %s35, 1
        %s312 = scalar_lea.sflag [#allocation3], %s311
        %s313 = sand.u32 %s35, 1
        %s314 = smul.addr %s313, 64
        %s315 = scalar_lea.vmem [#allocation2], %s314
        %p316 = pneg %p48
        %p317 = pneg %p45
        %s318 = sand.u32 %s27, 1
        %s319 = scalar_lea.sflag [#allocation6], %s318
        %s320 = sand.u32 %s61, 1
        %s321 = smul.addr %s320, 128
        %s322 = scalar_lea.vmem [#allocation5], %s321
        %p323 = pneg %p74
        %p324 = pneg %p71
        %p325 = pneg %p95
        %p326 = pneg %p92
        %p327 = pneg %p116
        %p328 = pneg %p113
        %p329 = pneg %p137
        %p330 = pneg %p134
        %p331 = pneg %p158
        %p332 = pneg %p155
        %p333 = pneg %p184
        %p334 = pneg %p181
        %s335 = sand.u32 %s171, 1
        %s336 = scalar_lea.sflag [#allocation4], %s335
        %s337 = sand.u32 %s171, 1
        %s338 = smul.addr %s337, 64
        %s339 = scalar_lea.vmem [#allocation10], %s338
        %s340 = smul.u32 16, %s27
        %s341 = smul.u32 16, %s27
        %s342 = smul.u32 16, %s27
        %v344 = vld [vmem:[%s298] sm:$0xff]
        %v345 = vld [vmem:[%s298 + $0x8] sm:$0xff]
        %v346 = vld [vmem:[%s298 + $0x10] sm:$0xff]
        %v347 = vld [vmem:[%s298 + $0x18] sm:$0xff]
        %v348 = vld [vmem:[%s298 + $0x20] sm:$0xff]
        %v349 = vld [vmem:[%s298 + $0x28] sm:$0xff]
        %v350 = vld [vmem:[%s298 + $0x30] sm:$0xff]
        %v351 = vld [vmem:[%s298 + $0x38] sm:$0xff]
        %v352 = vld [vmem:[%s298 + $0x40] sm:$0xff]
        %v353 = vld [vmem:[%s298 + $0x48] sm:$0xff]
        %v354 = vld [vmem:[%s298 + $0x50] sm:$0xff]
        %v355 = vld [vmem:[%s298 + $0x58] sm:$0xff]
        %v356 = vld [vmem:[%s298 + $0x60] sm:$0xff]
        %v357 = vld [vmem:[%s298 + $0x68] sm:$0xff]
        %v358 = vld [vmem:[%s298 + $0x70] sm:$0xff]
        %v359 = vld [vmem:[%s298 + $0x78] sm:$0xff]
        %v360 = vld [vmem:[#allocation7] sm:$0xf]
        %v361 = vld [vmem:[#allocation7 + $0x4] sm:$0xf]
        %v362 = vld [vmem:[#allocation7 + $0x8] sm:$0xf]
        %v363 = vld [vmem:[#allocation7 + $0xc] sm:$0xf]
        %v364 = vld [vmem:[#allocation7 + $0x10] sm:$0xf]
        %v365 = vld [vmem:[#allocation7 + $0x14] sm:$0xf]
        %v366 = vld [vmem:[#allocation7 + $0x18] sm:$0xf]
        %v367 = vld [vmem:[#allocation7 + $0x1c] sm:$0xf]
        %v368 = vld [vmem:[#allocation7 + $0x20] sm:$0xf]
        %v369 = vld [vmem:[#allocation7 + $0x24] sm:$0xf]
        %v370 = vld [vmem:[#allocation7 + $0x28] sm:$0xf]
        %v371 = vld [vmem:[#allocation7 + $0x2c] sm:$0xf]
        %v372 = vld [vmem:[#allocation7 + $0x30] sm:$0xf]
        %v373 = vld [vmem:[#allocation7 + $0x34] sm:$0xf]
        %v374 = vld [vmem:[#allocation7 + $0x38] sm:$0xf]
        %v375 = vld [vmem:[#allocation7 + $0x3c] sm:$0xf]
        %v376 = vld [vmem:[#allocation7 + $0x40] sm:$0xf]
        %v377 = vld [vmem:[#allocation7 + $0x44] sm:$0xf]
        %v378 = vld [vmem:[#allocation7 + $0x48] sm:$0xf]
        %v379 = vld [vmem:[#allocation7 + $0x4c] sm:$0xf]
        %v380 = vld [vmem:[#allocation7 + $0x50] sm:$0xf]
        %v381 = vld [vmem:[#allocation7 + $0x54] sm:$0xf]
        %v382 = vld [vmem:[#allocation7 + $0x58] sm:$0xf]
        %v383 = vld [vmem:[#allocation7 + $0x5c] sm:$0xf]
        %v384 = vld [vmem:[#allocation7 + $0x60] sm:$0xf]
        %v385 = vld [vmem:[#allocation7 + $0x64] sm:$0xf]
        %v386 = vld [vmem:[#allocation7 + $0x68] sm:$0xf]
        %v387 = vld [vmem:[#allocation7 + $0x6c] sm:$0xf]
        %v388 = vld [vmem:[#allocation7 + $0x70] sm:$0xf]
        %v389 = vld [vmem:[#allocation7 + $0x74] sm:$0xf]
        %v390 = vld [vmem:[#allocation7 + $0x78] sm:$0xf]
        %v391 = vld [vmem:[#allocation7 + $0x7c] sm:$0xf]
        %v392 = vld [vmem:[%s3] sm:$0x1]
        %v394 = vlaneseq
        %v395 = vshrl.u32 %v394, 7
        %v396 = vsub.s32 0, %v395
        %v397 = vrot.slane %v392, %v396
        %v415 = vunpack.c.l.b16 %v344
        %v416 = vunpack.c.h.b16 %v344
        %v417 = vunpack.c.l.b16 %v345
        %v418 = vunpack.c.h.b16 %v345
        %v419 = vunpack.c.l.b16 %v346
        %v420 = vunpack.c.h.b16 %v346
        %v421 = vunpack.c.l.b16 %v347
        %v422 = vunpack.c.h.b16 %v347
        %v423 = vunpack.c.l.b16 %v348
        %v424 = vunpack.c.h.b16 %v348
        %v425 = vunpack.c.l.b16 %v349
        %v426 = vunpack.c.h.b16 %v349
        %v427 = vunpack.c.l.b16 %v350
        %v428 = vunpack.c.h.b16 %v350
        %v429 = vunpack.c.l.b16 %v351
        %v430 = vunpack.c.h.b16 %v351
        %v431 = vunpack.c.l.b16 %v352
        %v432 = vunpack.c.h.b16 %v352
        %v433 = vunpack.c.l.b16 %v353
        %v434 = vunpack.c.h.b16 %v353
        %v435 = vunpack.c.l.b16 %v354
        %v436 = vunpack.c.h.b16 %v354
        %v437 = vunpack.c.l.b16 %v355
        %v438 = vunpack.c.h.b16 %v355
        %v439 = vunpack.c.l.b16 %v356
        %v440 = vunpack.c.h.b16 %v356
        %v441 = vunpack.c.l.b16 %v357
        %v442 = vunpack.c.h.b16 %v357
        %v443 = vunpack.c.l.b16 %v358
        %v444 = vunpack.c.h.b16 %v358
        %v445 = vunpack.c.l.b16 %v359
        %v446 = vunpack.c.h.b16 %v359
        %v447 = vpack.c.b16 %v417, %v415
        %v448 = vpack.c.b16 %v418, %v416
        %v449 = vpack.c.b16 %v421, %v419
        %v450 = vpack.c.b16 %v422, %v420
        %v451 = vpack.c.b16 %v425, %v423
        %v452 = vpack.c.b16 %v426, %v424
        %v453 = vpack.c.b16 %v429, %v427
        %v454 = vpack.c.b16 %v430, %v428
        %v455 = vpack.c.b16 %v433, %v431
        %v456 = vpack.c.b16 %v434, %v432
        %v457 = vpack.c.b16 %v437, %v435
        %v458 = vpack.c.b16 %v438, %v436
        %v459 = vpack.c.b16 %v441, %v439
        %v460 = vpack.c.b16 %v442, %v440
        %v461 = vpack.c.b16 %v445, %v443
        %v462 = vpack.c.b16 %v446, %v444
        %v511 = vunpack.c.l.b16 %v360
        %v512 = vunpack.c.l.b16 %v361
        %v513 = vunpack.c.l.b16 %v362
        %v514 = vunpack.c.l.b16 %v363
        %v515 = vunpack.c.l.b16 %v364
        %v516 = vunpack.c.l.b16 %v365
        %v517 = vunpack.c.l.b16 %v366
        %v518 = vunpack.c.l.b16 %v367
        %v519 = vunpack.c.l.b16 %v368
        %v520 = vunpack.c.l.b16 %v369
        %v521 = vunpack.c.l.b16 %v370
        %v522 = vunpack.c.l.b16 %v371
        %v523 = vunpack.c.l.b16 %v372
        %v524 = vunpack.c.l.b16 %v373
        %v525 = vunpack.c.l.b16 %v374
        %v526 = vunpack.c.l.b16 %v375
        %v527 = vunpack.c.l.b16 %v376
        %v528 = vunpack.c.l.b16 %v377
        %v529 = vunpack.c.l.b16 %v378
        %v530 = vunpack.c.l.b16 %v379
        %v531 = vunpack.c.l.b16 %v380
        %v532 = vunpack.c.l.b16 %v381
        %v533 = vunpack.c.l.b16 %v382
        %v534 = vunpack.c.l.b16 %v383
        %v535 = vunpack.c.l.b16 %v384
        %v536 = vunpack.c.l.b16 %v385
        %v537 = vunpack.c.l.b16 %v386
        %v538 = vunpack.c.l.b16 %v387
        %v539 = vunpack.c.l.b16 %v388
        %v540 = vunpack.c.l.b16 %v389
        %v541 = vunpack.c.l.b16 %v390
        %v542 = vunpack.c.l.b16 %v391
        %v543 = vpack.c.b16 %v512, %v511
        %v544 = vpack.c.b16 %v514, %v513
        %v545 = vpack.c.b16 %v516, %v515
        %v546 = vpack.c.b16 %v518, %v517
        %v547 = vpack.c.b16 %v520, %v519
        %v548 = vpack.c.b16 %v522, %v521
        %v549 = vpack.c.b16 %v524, %v523
        %v550 = vpack.c.b16 %v526, %v525
        %v551 = vpack.c.b16 %v528, %v527
        %v552 = vpack.c.b16 %v530, %v529
        %v553 = vpack.c.b16 %v532, %v531
        %v554 = vpack.c.b16 %v534, %v533
        %v555 = vpack.c.b16 %v536, %v535
        %v556 = vpack.c.b16 %v538, %v537
        %v557 = vpack.c.b16 %v540, %v539
        %v558 = vpack.c.b16 %v542, %v541
        %575 = vmatprep.subr.bf16.mxu0 0
        %576 = vmatpush1.bf16.msra.mxu0 %v543
        %577 = vmatprep.subr.bf16.mxu0 0
        %578 = vmatpush1.bf16.msra.mxu0 %v544
        %579 = vmatprep.subr.bf16.mxu0 0
        %580 = vmatpush1.bf16.msra.mxu0 %v545
        %581 = vmatprep.subr.bf16.mxu0 0
        %582 = vmatpush1.bf16.msra.mxu0 %v546
        %583 = vmatprep.subr.bf16.mxu0 0
        %584 = vmatpush1.bf16.msra.mxu0 %v547
        %585 = vmatprep.subr.bf16.mxu0 0
        %586 = vmatpush1.bf16.msra.mxu0 %v548
        %587 = vmatprep.subr.bf16.mxu0 0
        %588 = vmatpush1.bf16.msra.mxu0 %v549
        %589 = vmatprep.subr.bf16.mxu0 0
        %590 = vmatpush1.bf16.msra.mxu0 %v550
        %591 = vmatprep.subr.bf16.mxu0 0
        %592 = vmatpush1.bf16.msra.mxu0 %v551
        %593 = vmatprep.subr.bf16.mxu0 0
        %594 = vmatpush1.bf16.msra.mxu0 %v552
        %595 = vmatprep.subr.bf16.mxu0 0
        %596 = vmatpush1.bf16.msra.mxu0 %v553
        %597 = vmatprep.subr.bf16.mxu0 0
        %598 = vmatpush1.bf16.msra.mxu0 %v554
        %599 = vmatprep.subr.bf16.mxu0 0
        %600 = vmatpush1.bf16.msra.mxu0 %v555
        %601 = vmatprep.subr.bf16.mxu0 0
        %602 = vmatpush1.bf16.msra.mxu0 %v556
        %603 = vmatprep.subr.bf16.mxu0 0
        %604 = vmatpush1.bf16.msra.mxu0 %v557
        %605 = vmatprep.subr.bf16.mxu0 0
        %606 = vmatpush1.bf16.msra.mxu0 %v558
        %607 = vmatprep.mubr.bf16.mxu0 %v448
        %608 = vmatmul.mubr.bf16.gmra.mrb[0].mxu0 %v447
        %v609 = vpop.f32.mrb[0].mxu0
        %v610 = vadd.f32 %v397, %v609
        %v611 = vpop.f32.mrb[0].mxu0
        %v612 = vpop.f32.mrb[0].mxu0
        %v613 = vadd.f32 %v397, %v612
        %v614 = vpop.f32.mrb[0].mxu0
        %615 = vmatprep.mubr.bf16.mxu0 %v450
        %616 = vmatmul.mubr.bf16.gmra.mrb[0].mxu0 %v449
        %v617 = vpop.f32.mrb[0].mxu0
        %v618 = vadd.f32 %v397, %v617
        %v619 = vpop.f32.mrb[0].mxu0
        %v620 = vpop.f32.mrb[0].mxu0
        %v621 = vadd.f32 %v397, %v620
        %v622 = vpop.f32.mrb[0].mxu0
        %623 = vmatprep.mubr.bf16.mxu0 %v452
        %624 = vmatmul.mubr.bf16.gmra.mrb[0].mxu0 %v451
        %v625 = vpop.f32.mrb[0].mxu0
        %v626 = vadd.f32 %v397, %v625
        %v627 = vpop.f32.mrb[0].mxu0
        %v628 = vpop.f32.mrb[0].mxu0
        %v629 = vadd.f32 %v397, %v628
        %v630 = vpop.f32.mrb[0].mxu0
        %631 = vmatprep.mubr.bf16.mxu0 %v454
        %632 = vmatmul.mubr.bf16.gmra.mrb[0].mxu0 %v453
        %v633 = vpop.f32.mrb[0].mxu0
        %v634 = vadd.f32 %v397, %v633
        %v635 = vpop.f32.mrb[0].mxu0
        %v636 = vpop.f32.mrb[0].mxu0
        %v637 = vadd.f32 %v397, %v636
        %v638 = vpop.f32.mrb[0].mxu0
        %639 = vmatprep.mubr.bf16.mxu0 %v456
        %640 = vmatmul.mubr.bf16.gmra.mrb[0].mxu0 %v455
        %v641 = vpop.f32.mrb[0].mxu0
        %v642 = vadd.f32 %v397, %v641
        %v643 = vpop.f32.mrb[0].mxu0
        %v644 = vpop.f32.mrb[0].mxu0
        %v645 = vadd.f32 %v397, %v644
        %v646 = vpop.f32.mrb[0].mxu0
        %647 = vmatprep.mubr.bf16.mxu0 %v458
        %648 = vmatmul.mubr.bf16.gmra.mrb[0].mxu0 %v457
        %v649 = vpop.f32.mrb[0].mxu0
        %v650 = vadd.f32 %v397, %v649
        %v651 = vpop.f32.mrb[0].mxu0
        %v652 = vpop.f32.mrb[0].mxu0
        %v653 = vadd.f32 %v397, %v652
        %v654 = vpop.f32.mrb[0].mxu0
        %655 = vmatprep.mubr.bf16.mxu0 %v460
        %656 = vmatmul.mubr.bf16.gmra.mrb[0].mxu0 %v459
        %v657 = vpop.f32.mrb[0].mxu0
        %v658 = vadd.f32 %v397, %v657
        %v659 = vpop.f32.mrb[0].mxu0
        %v660 = vpop.f32.mrb[0].mxu0
        %v661 = vadd.f32 %v397, %v660
        %v662 = vpop.f32.mrb[0].mxu0
        %663 = vmatprep.mubr.bf16.mxu0 %v462
        %664 = vmatmul.mubr.bf16.gmra.mrb[0].mxu0 %v461
        %v665 = vpop.f32.mrb[0].mxu0
        %v666 = vadd.f32 %v397, %v665
        %v667 = vpop.f32.mrb[0].mxu0
        %v668 = vpop.f32.mrb[0].mxu0
        %v669 = vadd.f32 %v397, %v668
        %v670 = vpop.f32.mrb[0].mxu0
        %671 = vdwg.mxu0
        %v672 = vld [vmem:[%s289] sm:$0xf]
        %v673 = vld [vmem:[%s289 + $0x4] sm:$0xf]
        %v674 = vld [vmem:[%s289 + $0x8] sm:$0xf]
        %v675 = vld [vmem:[%s289 + $0xc] sm:$0xf]
        %v676 = vld [vmem:[%s289 + $0x10] sm:$0xf]
        %v677 = vld [vmem:[%s289 + $0x14] sm:$0xf]
        %v678 = vld [vmem:[%s289 + $0x18] sm:$0xf]
        %v679 = vld [vmem:[%s289 + $0x1c] sm:$0xf]
        %v680 = vld [vmem:[%s289 + $0x20] sm:$0xf]
        %v681 = vld [vmem:[%s289 + $0x24] sm:$0xf]
        %v682 = vld [vmem:[%s289 + $0x28] sm:$0xf]
        %v683 = vld [vmem:[%s289 + $0x2c] sm:$0xf]
        %v684 = vld [vmem:[%s289 + $0x30] sm:$0xf]
        %v685 = vld [vmem:[%s289 + $0x34] sm:$0xf]
        %v686 = vld [vmem:[%s289 + $0x38] sm:$0xf]
        %v687 = vld [vmem:[%s289 + $0x3c] sm:$0xf]
        %v688 = vpack.c.bf16 %v613, %v610
        %v689 = vpack.c.bf16 %v621, %v618
        %v690 = vpack.c.bf16 %v629, %v626
        %v691 = vpack.c.bf16 %v637, %v634
        %v692 = vpack.c.bf16 %v645, %v642
        %v693 = vpack.c.bf16 %v653, %v650
        %v694 = vpack.c.bf16 %v661, %v658
        %v695 = vpack.c.bf16 %v669, %v666
        %v712 = vunpack.c.l.b16 %v672
        %v713 = vunpack.c.l.b16 %v673
        %v714 = vunpack.c.l.b16 %v674
        %v715 = vunpack.c.l.b16 %v675
        %v716 = vunpack.c.l.b16 %v676
        %v717 = vunpack.c.l.b16 %v677
        %v718 = vunpack.c.l.b16 %v678
        %v719 = vunpack.c.l.b16 %v679
        %v720 = vunpack.c.l.b16 %v680
        %v721 = vunpack.c.l.b16 %v681
        %v722 = vunpack.c.l.b16 %v682
        %v723 = vunpack.c.l.b16 %v683
        %v724 = vunpack.c.l.b16 %v684
        %v725 = vunpack.c.l.b16 %v685
        %v726 = vunpack.c.l.b16 %v686
        %v727 = vunpack.c.l.b16 %v687
        %v728 = vpack.c.b16 %v713, %v712
        %v729 = vpack.c.b16 %v715, %v714
        %v730 = vpack.c.b16 %v717, %v716
        %v731 = vpack.c.b16 %v719, %v718
        %v732 = vpack.c.b16 %v721, %v720
        %v733 = vpack.c.b16 %v723, %v722
        %v734 = vpack.c.b16 %v725, %v724
        %v735 = vpack.c.b16 %v727, %v726
        %v744 = vld [vmem:[#allocation8] sm:$0xf]
        %v745 = vld [vmem:[#allocation8 + $0x4] sm:$0xf]
        %v746 = vld [vmem:[#allocation8 + $0x8] sm:$0xf]
        %v747 = vld [vmem:[#allocation8 + $0xc] sm:$0xf]
        %v748 = vld [vmem:[#allocation8 + $0x10] sm:$0xf]
        %v749 = vld [vmem:[#allocation8 + $0x14] sm:$0xf]
        %v750 = vld [vmem:[#allocation8 + $0x18] sm:$0xf]
        %v751 = vld [vmem:[#allocation8 + $0x1c] sm:$0xf]
        %v752 = vld [vmem:[#allocation8 + $0x20] sm:$0xf]
        %v753 = vld [vmem:[#allocation8 + $0x24] sm:$0xf]
        %v754 = vld [vmem:[#allocation8 + $0x28] sm:$0xf]
        %v755 = vld [vmem:[#allocation8 + $0x2c] sm:$0xf]
        %v756 = vld [vmem:[#allocation8 + $0x30] sm:$0xf]
        %v757 = vld [vmem:[#allocation8 + $0x34] sm:$0xf]
        %v758 = vld [vmem:[#allocation8 + $0x38] sm:$0xf]
        %v759 = vld [vmem:[#allocation8 + $0x3c] sm:$0xf]
        %v760 = vld [vmem:[#allocation8 + $0x40] sm:$0xf]
        %v761 = vld [vmem:[#allocation8 + $0x44] sm:$0xf]
        %v762 = vld [vmem:[#allocation8 + $0x48] sm:$0xf]
        %v763 = vld [vmem:[#allocation8 + $0x4c] sm:$0xf]
        %v764 = vld [vmem:[#allocation8 + $0x50] sm:$0xf]
        %v765 = vld [vmem:[#allocation8 + $0x54] sm:$0xf]
        %v766 = vld [vmem:[#allocation8 + $0x58] sm:$0xf]
        %v767 = vld [vmem:[#allocation8 + $0x5c] sm:$0xf]
        %v768 = vld [vmem:[#allocation8 + $0x60] sm:$0xf]
        %v769 = vld [vmem:[#allocation8 + $0x64] sm:$0xf]
        %v770 = vld [vmem:[#allocation8 + $0x68] sm:$0xf]
        %v771 = vld [vmem:[#allocation8 + $0x6c] sm:$0xf]
        %v772 = vld [vmem:[#allocation8 + $0x70] sm:$0xf]
        %v773 = vld [vmem:[#allocation8 + $0x74] sm:$0xf]
        %v774 = vld [vmem:[#allocation8 + $0x78] sm:$0xf]
        %v775 = vld [vmem:[#allocation8 + $0x7c] sm:$0xf]
        %v776 = vld [vmem:[%s5] sm:$0x1]
        %v778 = vlaneseq
        %v779 = vshrl.u32 %v778, 7
        %v780 = vsub.s32 0, %v779
        %v781 = vrot.slane %v776, %v780
        %v815 = vunpack.c.l.b16 %v744
        %v816 = vunpack.c.l.b16 %v745
        %v817 = vunpack.c.l.b16 %v746
        %v818 = vunpack.c.l.b16 %v747
        %v819 = vunpack.c.l.b16 %v748
        %v820 = vunpack.c.l.b16 %v749
        %v821 = vunpack.c.l.b16 %v750
        %v822 = vunpack.c.l.b16 %v751
        %v823 = vunpack.c.l.b16 %v752
        %v824 = vunpack.c.l.b16 %v753
        %v825 = vunpack.c.l.b16 %v754
        %v826 = vunpack.c.l.b16 %v755
        %v827 = vunpack.c.l.b16 %v756
        %v828 = vunpack.c.l.b16 %v757
        %v829 = vunpack.c.l.b16 %v758
        %v830 = vunpack.c.l.b16 %v759
        %v831 = vunpack.c.l.b16 %v760
        %v832 = vunpack.c.l.b16 %v761
        %v833 = vunpack.c.l.b16 %v762
        %v834 = vunpack.c.l.b16 %v763
        %v835 = vunpack.c.l.b16 %v764
        %v836 = vunpack.c.l.b16 %v765
        %v837 = vunpack.c.l.b16 %v766
        %v838 = vunpack.c.l.b16 %v767
        %v839 = vunpack.c.l.b16 %v768
        %v840 = vunpack.c.l.b16 %v769
        %v841 = vunpack.c.l.b16 %v770
        %v842 = vunpack.c.l.b16 %v771
        %v843 = vunpack.c.l.b16 %v772
        %v844 = vunpack.c.l.b16 %v773
        %v845 = vunpack.c.l.b16 %v774
        %v846 = vunpack.c.l.b16 %v775
        %v847 = vpack.c.b16 %v816, %v815
        %v848 = vpack.c.b16 %v818, %v817
        %v849 = vpack.c.b16 %v820, %v819
        %v850 = vpack.c.b16 %v822, %v821
        %v851 = vpack.c.b16 %v824, %v823
        %v852 = vpack.c.b16 %v826, %v825
        %v853 = vpack.c.b16 %v828, %v827
        %v854 = vpack.c.b16 %v830, %v829
        %v855 = vpack.c.b16 %v832, %v831
        %v856 = vpack.c.b16 %v834, %v833
        %v857 = vpack.c.b16 %v836, %v835
        %v858 = vpack.c.b16 %v838, %v837
        %v859 = vpack.c.b16 %v840, %v839
        %v860 = vpack.c.b16 %v842, %v841
        %v861 = vpack.c.b16 %v844, %v843
        %v862 = vpack.c.b16 %v846, %v845
        %879 = vmatprep.subr.bf16.mxu0 0
        %880 = vmatpush1.bf16.msra.mxu0 %v847
        %881 = vmatprep.subr.bf16.mxu0 0
        %882 = vmatpush1.bf16.msra.mxu0 %v848
        %883 = vmatprep.subr.bf16.mxu0 0
        %884 = vmatpush1.bf16.msra.mxu0 %v849
        %885 = vmatprep.subr.bf16.mxu0 0
        %886 = vmatpush1.bf16.msra.mxu0 %v850
        %887 = vmatprep.subr.bf16.mxu0 0
        %888 = vmatpush1.bf16.msra.mxu0 %v851
        %889 = vmatprep.subr.bf16.mxu0 0
        %890 = vmatpush1.bf16.msra.mxu0 %v852
        %891 = vmatprep.subr.bf16.mxu0 0
        %892 = vmatpush1.bf16.msra.mxu0 %v853
        %893 = vmatprep.subr.bf16.mxu0 0
        %894 = vmatpush1.bf16.msra.mxu0 %v854
        %895 = vmatprep.subr.bf16.mxu0 0
        %896 = vmatpush1.bf16.msra.mxu0 %v855
        %897 = vmatprep.subr.bf16.mxu0 0
        %898 = vmatpush1.bf16.msra.mxu0 %v856
        %899 = vmatprep.subr.bf16.mxu0 0
        %900 = vmatpush1.bf16.msra.mxu0 %v857
        %901 = vmatprep.subr.bf16.mxu0 0
        %902 = vmatpush1.bf16.msra.mxu0 %v858
        %903 = vmatprep.subr.bf16.mxu0 0
        %904 = vmatpush1.bf16.msra.mxu0 %v859
        %905 = vmatprep.subr.bf16.mxu0 0
        %906 = vmatpush1.bf16.msra.mxu0 %v860
        %907 = vmatprep.subr.bf16.mxu0 0
        %908 = vmatpush1.bf16.msra.mxu0 %v861
        %909 = vmatprep.subr.bf16.mxu0 0
        %910 = vmatpush1.bf16.msra.mxu0 %v862
        %911 = vmatprep.mubr.bf16.mxu0 %v688
        %912 = vmatmul.mubr.bf16.gmra.mrb[0].mxu0 %v728
        %v913 = vpop.f32.mrb[0].mxu0
        %v914 = vadd.f32 %v781, %v913
        %v915 = vpop.f32.mrb[0].mxu0
        %v916 = vpop.f32.mrb[0].mxu0
        %v917 = vadd.f32 %v781, %v916
        %v918 = vpop.f32.mrb[0].mxu0
        %919 = vmatprep.mubr.bf16.mxu0 %v689
        %920 = vmatmul.mubr.bf16.gmra.mrb[0].mxu0 %v729
        %v921 = vpop.f32.mrb[0].mxu0
        %v922 = vadd.f32 %v781, %v921
        %v923 = vpop.f32.mrb[0].mxu0
        %v924 = vpop.f32.mrb[0].mxu0
        %v925 = vadd.f32 %v781, %v924
        %v926 = vpop.f32.mrb[0].mxu0
        %927 = vmatprep.mubr.bf16.mxu0 %v690
        %928 = vmatmul.mubr.bf16.gmra.mrb[0].mxu0 %v730
        %v929 = vpop.f32.mrb[0].mxu0
        %v930 = vadd.f32 %v781, %v929
        %v931 = vpop.f32.mrb[0].mxu0
        %v932 = vpop.f32.mrb[0].mxu0
        %v933 = vadd.f32 %v781, %v932
        %v934 = vpop.f32.mrb[0].mxu0
        %935 = vmatprep.mubr.bf16.mxu0 %v691
        %936 = vmatmul.mubr.bf16.gmra.mrb[0].mxu0 %v731
        %v937 = vpop.f32.mrb[0].mxu0
        %v938 = vadd.f32 %v781, %v937
        %v939 = vpop.f32.mrb[0].mxu0
        %v940 = vpop.f32.mrb[0].mxu0
        %v941 = vadd.f32 %v781, %v940
        %v942 = vpop.f32.mrb[0].mxu0
        %943 = vmatprep.mubr.bf16.mxu0 %v692
        %944 = vmatmul.mubr.bf16.gmra.mrb[0].mxu0 %v732
        %v945 = vpop.f32.mrb[0].mxu0
        %v946 = vadd.f32 %v781, %v945
        %v947 = vpop.f32.mrb[0].mxu0
        %v948 = vpop.f32.mrb[0].mxu0
        %v949 = vadd.f32 %v781, %v948
        %v950 = vpop.f32.mrb[0].mxu0
        %951 = vmatprep.mubr.bf16.mxu0 %v693
        %952 = vmatmul.mubr.bf16.gmra.mrb[0].mxu0 %v733
        %v953 = vpop.f32.mrb[0].mxu0
        %v954 = vadd.f32 %v781, %v953
        %v955 = vpop.f32.mrb[0].mxu0
        %v956 = vpop.f32.mrb[0].mxu0
        %v957 = vadd.f32 %v781, %v956
        %v958 = vpop.f32.mrb[0].mxu0
        %959 = vmatprep.mubr.bf16.mxu0 %v694
        %960 = vmatmul.mubr.bf16.gmra.mrb[0].mxu0 %v734
        %v961 = vpop.f32.mrb[0].mxu0
        %v962 = vadd.f32 %v781, %v961
        %v963 = vpop.f32.mrb[0].mxu0
        %v964 = vpop.f32.mrb[0].mxu0
        %v965 = vadd.f32 %v781, %v964
        %v966 = vpop.f32.mrb[0].mxu0
        %967 = vmatprep.mubr.bf16.mxu0 %v695
        %968 = vmatmul.mubr.bf16.gmra.mrb[0].mxu0 %v735
        %v969 = vpop.f32.mrb[0].mxu0
        %v970 = vadd.f32 %v781, %v969
        %v971 = vpop.f32.mrb[0].mxu0
        %v972 = vpop.f32.mrb[0].mxu0
        %v973 = vadd.f32 %v781, %v972
        %v974 = vpop.f32.mrb[0].mxu0
        %975 = vdwg.mxu0
        %v976 = vmax.f32 %v914, 0.0
        %v977 = vmax.f32 %v917, 0.0
        %v978 = vmax.f32 %v922, 0.0
        %v979 = vmax.f32 %v925, 0.0
        %v980 = vmax.f32 %v930, 0.0
        %v981 = vmax.f32 %v933, 0.0
        %v982 = vmax.f32 %v938, 0.0
        %v983 = vmax.f32 %v941, 0.0
        %v984 = vmax.f32 %v946, 0.0
        %v985 = vmax.f32 %v949, 0.0
        %v986 = vmax.f32 %v954, 0.0
        %v987 = vmax.f32 %v957, 0.0
        %v988 = vmax.f32 %v962, 0.0
        %v989 = vmax.f32 %v965, 0.0
        %v990 = vmax.f32 %v970, 0.0
        %v991 = vmax.f32 %v973, 0.0
        %v992 = vpack.c.bf16 %v977, %v976
        %v993 = vpack.c.bf16 %v979, %v978
        %v994 = vpack.c.bf16 %v981, %v980
        %v995 = vpack.c.bf16 %v983, %v982
        %v996 = vpack.c.bf16 %v985, %v984
        %v997 = vpack.c.bf16 %v987, %v986
        %v998 = vpack.c.bf16 %v989, %v988
        %v999 = vpack.c.bf16 %v991, %v990
        %v1008 = vunpack.c.l.b16 %v992
        %v1009 = vunpack.c.h.b16 %v992
        %v1010 = vunpack.c.l.b16 %v993
        %v1011 = vunpack.c.h.b16 %v993
        %v1012 = vunpack.c.l.b16 %v994
        %v1013 = vunpack.c.h.b16 %v994
        %v1014 = vunpack.c.l.b16 %v995
        %v1015 = vunpack.c.h.b16 %v995
        %v1016 = vunpack.c.l.b16 %v996
        %v1017 = vunpack.c.h.b16 %v996
        %v1018 = vunpack.c.l.b16 %v997
        %v1019 = vunpack.c.h.b16 %v997
        %v1020 = vunpack.c.l.b16 %v998
        %v1021 = vunpack.c.h.b16 %v998
        %v1022 = vunpack.c.l.b16 %v999
        %v1023 = vunpack.c.h.b16 %v999
        %v1024 = vpack.c.b16 %v1008, %v1008
        %v1025 = vpack.c.b16 %v1009, %v1009
        %v1026 = vpack.c.b16 %v1010, %v1010
        %v1027 = vpack.c.b16 %v1011, %v1011
        %v1028 = vpack.c.b16 %v1012, %v1012
        %v1029 = vpack.c.b16 %v1013, %v1013
        %v1030 = vpack.c.b16 %v1014, %v1014
        %v1031 = vpack.c.b16 %v1015, %v1015
        %v1032 = vpack.c.b16 %v1016, %v1016
        %v1033 = vpack.c.b16 %v1017, %v1017
        %v1034 = vpack.c.b16 %v1018, %v1018
        %v1035 = vpack.c.b16 %v1019, %v1019
        %v1036 = vpack.c.b16 %v1020, %v1020
        %v1037 = vpack.c.b16 %v1021, %v1021
        %v1038 = vpack.c.b16 %v1022, %v1022
        %v1039 = vpack.c.b16 %v1023, %v1023
        %1056 = vst [vmem:[%s339] sm:$0xf] %v1024
        %1057 = vst [vmem:[%s339 + $0x4] sm:$0xf] %v1025
        %1058 = vst [vmem:[%s339 + $0x8] sm:$0xf] %v1026
        %1059 = vst [vmem:[%s339 + $0xc] sm:$0xf] %v1027
        %1060 = vst [vmem:[%s339 + $0x10] sm:$0xf] %v1028
        %1061 = vst [vmem:[%s339 + $0x14] sm:$0xf] %v1029
        %1062 = vst [vmem:[%s339 + $0x18] sm:$0xf] %v1030
        %1063 = vst [vmem:[%s339 + $0x1c] sm:$0xf] %v1031
        %1064 = vst [vmem:[%s339 + $0x20] sm:$0xf] %v1032
        %1065 = vst [vmem:[%s339 + $0x24] sm:$0xf] %v1033
        %1066 = vst [vmem:[%s339 + $0x28] sm:$0xf] %v1034
        %1067 = vst [vmem:[%s339 + $0x2c] sm:$0xf] %v1035
        %1068 = vst [vmem:[%s339 + $0x30] sm:$0xf] %v1036
        %1069 = vst [vmem:[%s339 + $0x34] sm:$0xf] %v1037
        %1070 = vst [vmem:[%s339 + $0x38] sm:$0xf] %v1038
        %1071 = vst [vmem:[%s339 + $0x3c] sm:$0xf] %v1039
        %s1072 = sand.u32 %s171, 1
        %s1073 = scalar_lea.sflag [#allocation4], %s1072
        %s1074 = sand.u32 %s171, 1
        %s1075 = smul.addr %s1074, 64
        %s1076 = scalar_lea.vmem [#allocation10], %s1075
        // Predicated region
        $region61: #{tpu_custom_call.1} parent=43 // pred_check
          %p1077 = pneg %p181
        $region62: #{tpu_custom_call.1} parent=43 // pred_check_branch
          %1079 = sbr.rel (%p1077) target = $region64
        $region63: #{tpu_custom_call.1} parent=43 // pred_region
          %s1080 = smul.u32 16, %s27
          %s1082 = ssub.s32 1024, 1024
          %1083 = vsyncadd %s1073, %s1082
          %s1084 = smul.addr %s1080, 64
          %s1085 = scalar_lea.hbm %s6, %s1084
          %s1086 = sshll.u32 %s1076, 4
          %s1087 = int_to_ptr.vmem [resolvable:$true] %s1086
          %1092 = dma.vmem_to_hbm [thread:$0]  %s1087, 1024, %s1085, %s1073, 64, 64, 4
        $region64: #{tpu_custom_call.1} parent=43 // pred_fallthru
          _
      $region44: #{tpu_custom_call.1} parent=5 // pred_fallthru
        _
      %p1093 = scmp.le.s32.totalorder 2, %s22
      // Predicated region
      $region65: #{tpu_custom_call.1} parent=5 // pred_check
        %p1094 = pneg %p1093
      $region66: #{tpu_custom_call.1} parent=5 // pred_check_branch
        %1096 = sbr.rel (%p1094) target = $region68
      $region67: #{tpu_custom_call.1} parent=5 // pred_region
        %s1097 = ssub.s32 %s22, 2
        // Predicated region
        $region69: #{tpu_custom_call.1} parent=67 // pred_check
          %p1098 = pneg %p187
        $region70: #{tpu_custom_call.1} parent=67 // pred_check_branch
          %1100 = sbr.rel (%p1098) target = $region72
        $region71: #{tpu_custom_call.1} parent=67 // pred_region
          %s1101 = sand.u32 %s172, 1
          %s1102 = scalar_lea.sflag [#allocation4], %s1101
          %s1103 = sand.u32 %s172, 1
          %s1104 = smul.addr %s1103, 64
          %s1105 = scalar_lea.vmem [#allocation10], %s1104
          %1106 = dma.done %s1102, 1024
        $region72: #{tpu_custom_call.1} parent=67 // pred_fallthru
          _
      $region68: #{tpu_custom_call.1} parent=5 // pred_fallthru
        _
    $region6: #{tpu_custom_call.1} parent=1 // loop_footer
      %s26 = sadd.s32 1, %s22
    $region7: #{tpu_custom_call.1} parent=1 // loop_footer_branch
      %21 = sbr.rel target = $region3
    $region8: #{tpu_custom_call.1} parent=1 // loop_exit
      _
    %1107 = vsyncpa [#allocation3], 1
    %s1108 = scalar_lea.sflag [#allocation3], 1
    %1109 = vsyncpa %s1108, 1
    %1110 = vsyncpa [#allocation6], 1
    %s1111 = scalar_lea.sflag [#allocation6], 1
    %1112 = vsyncpa %s1111, 1
    %1113 = vsyncpa [#allocation9], 1
    %1114 = vsyncpa [#allocation4], 1
    %s1115 = scalar_lea.sflag [#allocation4], 1
    %1116 = vsyncpa %s1115, 1

</llo_original>
